<compile_context>
chip_gen: v7x
topology: tpu7x:2x2x1
jax: 0.10.0
libtpu: 0.0.40
codegen_flags: <defaults>
</compile_context>

<pallas_src>
import sys

import jax
import jax.numpy as jnp
from jax.experimental import pallas as pl
from jax.experimental.pallas import tpu as pltpu


def _cdiv(a, b):
    return (a + b - 1) // b


def _round_up(x, m):
    return _cdiv(x, m) * m


def _vmem_ceiling_bytes():
    """Per-generation scoped-VMEM budget: physical capacity minus headroom for Mosaic
    internal scratch / compiler temporaries (v7x ~52 MiB, v5e/v6e ~108 MiB)."""
    try:
        cap = int(pltpu.get_tpu_info().vmem_capacity_bytes)
    except Exception:
        cap = 64 << 20          # conservative fallback (v7x per-TensorCore VMEM)
    return max(16 << 20, min(cap - (12 << 20), int(cap * 0.85)))


# ----------------------------------------------------------------------------------
# Path A: weights fully VMEM-resident (small / medium FFN).
# ----------------------------------------------------------------------------------
def ffn_resident_kernel(x_ref, w1_ref, b1_ref, wuv_ref, w2_ref, b2_ref, o_ref):
    # x_ref:  (tm, dim_p)      bf16
    # w1_ref: (dim_p, hid_p)   bf16      b1_ref: (1, hid_p) f32
    # wuv_ref:(hid_p, 2*hid_p) bf16      (cols [:hid_p] = Wu^T, [hid_p:] = Wv^T)
    # w2_ref: (hid_p, dim_p)   bf16      b2_ref: (1, dim_p) f32
    hid_p = w1_ref.shape[1]

    # fc1: bf16 MXU matmul, f32 accumulation; bias in f32; back to bf16 for the next dot.
    h = (jnp.dot(x_ref[...], w1_ref[...], preferred_element_type=jnp.float32)
         + b1_ref[...]).astype(jnp.bfloat16)

    # Fused SwiGLU projections: one wide MXU pass, static split, gate math in f32
    # (sigmoid goes to the EUP slot), then straight to bf16 before fc2 to keep the
    # f32 temporary footprint small.
    uv = jnp.dot(h, wuv_ref[...], preferred_element_type=jnp.float32)
    g = uv[:, hid_p:]
    s = (uv[:, :hid_p] * (g * jax.nn.sigmoid(g))).astype(jnp.bfloat16)

    # dropout(p=0.2): inference mode -> identity.
    # TODO(synk): training-mode dropout would need pltpu.prng_seed / prng_random_bits.

    # fc2: bf16 MXU matmul, f32 accumulation; store bf16 (lane-dense output tile).
    y = jnp.dot(s, w2_ref[...], preferred_element_type=jnp.float32) + b2_ref[...]
    o_ref[...] = y.astype(o_ref.dtype)


# ----------------------------------------------------------------------------------
# Path B: hidden-dimension streaming with manual double-buffered weight DMAs.
# Used when the resident-weight design would not fit scoped VMEM (v7x, large hid).
# ----------------------------------------------------------------------------------
def _make_stream_kernel(num_blocks, th, hid_p):
    def kernel(x_ref, b1_ref, b2_ref, w1_hbm, wuv_hbm, w2_hbm, o_ref,
               w1_buf, wuv_buf, w2_buf, uv_acc, acc, sems):
        # x_ref:   (tm, dim_p)       bf16 VMEM
        # b1_ref:  (1, hid_p) f32    b2_ref: (1, dim_p) f32
        # w1_hbm:  (J, dim_p, th)    bf16 HBM  (column blocks of W1^T)
        # wuv_hbm: (J, th, 2*hid_p)  bf16 HBM  (row blocks of [Wu^T | Wv^T])
        # w2_hbm:  (J, th, dim_p)    bf16 HBM  (row blocks of W2^T)
        # w1_buf/wuv_buf/w2_buf: (2, ...) double-buffered VMEM copies of one block.
        # uv_acc:  (tm, 2*hid_p) f32 accumulator; acc: (tm, dim_p) f32 accumulator.
        def start_h(j, slot):
            pltpu.make_async_copy(w1_hbm.at[j], w1_buf.at[slot], sems.at[0, slot]).start()
            pltpu.make_async_copy(wuv_hbm.at[j], wuv_buf.at[slot], sems.at[1, slot]).start()

        def wait_h(slot):
            pltpu.make_async_copy(w1_hbm.at[0], w1_buf.at[slot], sems.at[0, slot]).wait()
            pltpu.make_async_copy(wuv_hbm.at[0], wuv_buf.at[slot], sems.at[1, slot]).wait()

        def start_o(j, slot):
            pltpu.make_async_copy(w2_hbm.at[j], w2_buf.at[slot], sems.at[2, slot]).start()

        def wait_o(slot):
            pltpu.make_async_copy(w2_hbm.at[0], w2_buf.at[slot], sems.at[2, slot]).wait()

        x = x_ref[...]
        start_h(0, 0)
        start_o(0, 0)     # prefetch the first fc2 weight block behind pass 1

        # Pass 1: fc1 column block fused with the matching [Wu|Wv] row block, accumulated
        # over hidden blocks into the f32 uv accumulator.
        # TODO(synk): for very large J switch these static (unrolled) loops to
        #             lax.fori_loop to bound code size.
        for j in range(num_blocks):
            slot = j & 1
            if j + 1 < num_blocks:
                start_h(j + 1, 1 - slot)
            wait_h(slot)
            h_j = (jnp.dot(x, w1_buf[slot], preferred_element_type=jnp.float32)
                   + b1_ref[:, j * th:(j + 1) * th]).astype(jnp.bfloat16)
            upd = jnp.dot(h_j, wuv_buf[slot], preferred_element_type=jnp.float32)
            if j == 0:
                uv_acc[...] = upd
            else:
                uv_acc[...] += upd

        # SwiGLU gate in f32 (sigmoid -> EUP), cast to bf16 before fc2.
        g = uv_acc[:, hid_p:]
        s = (uv_acc[:, :hid_p] * (g * jax.nn.sigmoid(g))).astype(jnp.bfloat16)
        # dropout(p=0.2): inference mode -> identity.
        # TODO(synk): training-mode dropout would mask `s` with pltpu.prng_random_bits.

        # Pass 2: fc2 over W2^T row blocks with an f32 accumulator (b2 folded into init).
        for j in range(num_blocks):
            slot = j & 1
            if j + 1 < num_blocks:
                start_o(j + 1, 1 - slot)
            wait_o(slot)
            upd = jnp.dot(s[:, j * th:(j + 1) * th], w2_buf[slot],
                          preferred_element_type=jnp.float32)
            if j == 0:
                acc[...] = upd + b2_ref[...]
            else:
                acc[...] += upd

        o_ref[...] = acc[...].astype(o_ref.dtype)

    return kernel


# ----------------------------------------------------------------------------------
# One-time weight preparation (outside the kernel call path).
# ----------------------------------------------------------------------------------
def prepare_ffn_params(w1, b1, wu, wv, w2, b2, block_h=None):
    """Transpose PyTorch (out,in) layouts, pad lane dims to multiples of 128, fuse
    Wu/Wv, cast matmul operands to bf16, and build hidden-block layouts for the
    streamed path (block j contiguous in HBM -> simple leading-axis DMA).
    Note: both the fused 2-D and the blocked 3-D weight copies are kept so either
    path can run; a production deployment would keep only the layout it needs."""
    hid, dim = w1.shape
    dim_p = _round_up(dim, 128)
    hid_p = _round_up(hid, 128)
    if block_h is None:
        block_h = 256 if hid_p % 256 == 0 else 128
    block_h = min(block_h, hid_p)
    assert hid_p % block_h == 0 and block_h % 128 == 0
    num_blocks = hid_p // block_h

    def pad2(a, rows, cols):
        return jnp.pad(a, ((0, rows - a.shape[0]), (0, cols - a.shape[1])))

    w1_t = pad2(w1.T, dim_p, hid_p).astype(jnp.bfloat16)                  # (dim_p, hid_p)
    wuv_t = jnp.concatenate(
        [pad2(wu.T, hid_p, hid_p), pad2(wv.T, hid_p, hid_p)], axis=1
    ).astype(jnp.bfloat16)                                                # (hid_p, 2*hid_p)
    w2_t = pad2(w2.T, hid_p, dim_p).astype(jnp.bfloat16)                  # (hid_p, dim_p)
    b1_p = jnp.pad(b1, (0, hid_p - hid)).reshape(1, hid_p).astype(jnp.float32)
    b2_p = jnp.pad(b2, (0, dim_p - dim)).reshape(1, dim_p).astype(jnp.float32)

    w1_blk = w1_t.reshape(dim_p, num_blocks, block_h).transpose(1, 0, 2)  # (J, dim_p, th)
    wuv_blk = wuv_t.reshape(num_blocks, block_h, 2 * hid_p)               # (J, th, 2*hid_p)
    w2_blk = w2_t.reshape(num_blocks, block_h, dim_p)                     # (J, th, dim_p)

    return dict(w1_t=w1_t, wuv_t=wuv_t, w2_t=w2_t, b1=b1_p, b2=b2_p,
                w1_blk=w1_blk, wuv_blk=wuv_blk, w2_blk=w2_blk,
                dim=dim, hidden=hid, dim_p=dim_p, hid_p=hid_p,
                block_h=block_h, num_hidden_blocks=num_blocks)


# ----------------------------------------------------------------------------------
# Wrapper.
# ----------------------------------------------------------------------------------
def feed_forward(x, params, *, tm=256, single_buffer_weights=True, force_stream=False):
    """x: (..., dim). Flattens leading dims to tokens, picks the resident or streamed
    weight path based on the per-generation VMEM budget, and slices padding back off."""
    dim, dim_p, hid_p = params["dim"], params["dim_p"], params["hid_p"]
    th, num_blocks = params["block_h"], params["num_hidden_blocks"]
    lead_shape = x.shape[:-1]
    x2 = x.reshape(-1, dim)
    N = x2.shape[0]

    ceiling = _vmem_ceiling_bytes()

    # Resident-weight footprint estimate (bf16 weights + f32 biases + tiles + temps).
    weight_bytes = 2 * (dim_p * hid_p + 2 * hid_p * hid_p + hid_p * dim_p)
    resident_need = (
        (1 if single_buffer_weights else 2) * weight_bytes
        + 2 * (hid_p + dim_p) * 4              # biases (f32, possibly double-buffered)
        + 2 * 2 * tm * dim_p * 2               # double-buffered x / out tiles (bf16)
        + tm * hid_p * 12                      # h (bf16) + uv (f32) + s (bf16) temporaries
        + (4 << 20))
    use_stream = force_stream or resident_need > ceiling

    # On small-VMEM parts (v7x) keep the token tile modest on the streamed path so the
    # f32 uv accumulator (tm * 2*hid_p * 4B) does not crowd out the weight-block buffers.
    if use_stream and ceiling < (80 << 20) and hid_p >= 4096:
        tm = min(tm, 128)

    # Token tile: 16-aligned (bf16 sublanes), prefer >=2 grid steps so v7x's two
    # TensorCores both get work, then shrink the tile to minimize padded rows.
    tm_eff = max(16, min(tm, _round_up(N, 16)))
    if N > 32 and _cdiv(N, tm_eff) < 2:
        tm_eff = min(tm_eff, _round_up(_cdiv(N, 2), 16))
    grid_m = _cdiv(N, tm_eff)
    tm_eff = _round_up(_cdiv(N, grid_m), 16)
    N_p = grid_m * tm_eff

    # Cast to bf16 BEFORE padding (halves the padded-copy HBM traffic); skip the pad
    # entirely when shapes are already aligned.
    x2 = x2.astype(jnp.bfloat16)
    if N_p != N or dim_p != dim:
        x2 = jnp.pad(x2, ((0, N_p - N), (0, dim_p - dim)))

    common = dict(
        out_shape=jax.ShapeDtypeStruct((N_p, dim_p), jnp.bfloat16),
        compiler_params=pltpu.CompilerParams(
            dimension_semantics=("parallel",),
            vmem_limit_bytes=int(ceiling)),
    )
    x_spec = pl.BlockSpec((tm_eff, dim_p), lambda i: (i, 0))
    o_spec = pl.BlockSpec((tm_eff, dim_p), lambda i: (i, 0))

    if use_stream:
        kernel = _make_stream_kernel(num_blocks, th, hid_p)
        out_p = pl.pallas_call(
            kernel,
            grid_spec=pltpu.PrefetchScalarGridSpec(
                num_scalar_prefetch=0,
                grid=(grid_m,),
                in_specs=[
                    x_spec,
                    pl.BlockSpec((1, hid_p), lambda i: (0, 0)),   # b1
                    pl.BlockSpec((1, dim_p), lambda i: (0, 0)),   # b2
                    pl.BlockSpec(memory_space=pl.ANY),            # W1^T blocks (HBM)
                    pl.BlockSpec(memory_space=pl.ANY),            # [Wu|Wv]^T blocks (HBM)
                    pl.BlockSpec(memory_space=pl.ANY),            # W2^T blocks (HBM)
                ],
                out_specs=o_spec,
                scratch_shapes=[
                    pltpu.VMEM((2, dim_p, th), jnp.bfloat16),       # w1 block double-buffer
                    pltpu.VMEM((2, th, 2 * hid_p), jnp.bfloat16),   # wuv block double-buffer
                    pltpu.VMEM((2, th, dim_p), jnp.bfloat16),       # w2 block double-buffer
                    pltpu.VMEM((tm_eff, 2 * hid_p), jnp.float32),   # uv accumulator
                    pltpu.VMEM((tm_eff, dim_p), jnp.float32),       # fc2 accumulator
                    pltpu.SemaphoreType.DMA((3, 2)),
                ]),
            **common,
        )(x2, params["b1"], params["b2"],
          params["w1_blk"], params["wuv_blk"], params["w2_blk"])
    else:
        def call_resident(single_buffer):
            def const_spec(shape):
                kw = {"pipeline_mode": pl.Buffered(1)} if single_buffer else {}
                return pl.BlockSpec(shape, lambda i: (0,) * len(shape), **kw)
            return pl.pallas_call(
                ffn_resident_kernel,
                grid_spec=pltpu.PrefetchScalarGridSpec(
                    num_scalar_prefetch=0,
                    grid=(grid_m,),
                    in_specs=[
                        x_spec,
                        const_spec((dim_p, hid_p)),       # W1^T
                        const_spec((1, hid_p)),           # b1
                        const_spec((hid_p, 2 * hid_p)),   # [Wu^T | Wv^T]
                        const_spec((hid_p, dim_p)),       # W2^T
                        const_spec((1, dim_p)),           # b2
                    ],
                    out_specs=o_spec),
                **common,
            )(x2, params["w1_t"], params["b1"], params["wuv_t"],
              params["w2_t"], params["b2"])

        if single_buffer_weights:
            try:
                out_p = jax.block_until_ready(call_resident(True))
            except Exception as e:   # log loudly instead of silently doubling weight VMEM
                print("WARNING: single-buffered (pl.Buffered(1)) weight BlockSpecs were "
                      f"rejected ({type(e).__name__}); falling back to double-buffered "
                      "weights (2x resident weight VMEM).", file=sys.stderr)
                out_p = call_resident(False)
        else:
            out_p = call_resident(False)

    # TODO(synk): in a latency-bound decode loop, prefetch the next layer's weight blocks
    #             with a cross-pallas_call DMA future (P10) to hide the first-step DMA.
    return out_p[:N, :dim].astype(x.dtype).reshape(lead_shape + (dim,))


def feed_forward_ref(x, w1, b1, wu, wv, w2, b2):
    h = x @ w1.T + b1
    u = h @ wu.T
    g = jax.nn.silu(h @ wv.T)
    return (u * g) @ w2.T + b2


if __name__ == "__main__":
    # Small shapes consistent with the module: batch=2, seq=8, dim=32, hidden=64.
    B, S, DIM, HID = 2, 8, 32, 64
    key = jax.random.PRNGKey(0)
    kx, k1, kb1, ku, kv, k2, kb2 = jax.random.split(key, 7)

    x = jax.random.normal(kx, (B, S, DIM), dtype=jnp.float32)

    # PyTorch Linear shapes: weight = (out, in).
    w1 = jax.random.normal(k1, (HID, DIM), dtype=jnp.float32) * 0.1   # fc1.weight
    b1 = jax.random.normal(kb1, (HID,), dtype=jnp.float32) * 0.1      # fc1.bias
    wu = jax.random.normal(ku, (HID, HID), dtype=jnp.float32) * 0.1   # swiglu.input_proj.weight
    wv = jax.random.normal(kv, (HID, HID), dtype=jnp.float32) * 0.1   # swiglu.gate_proj.weight
    w2 = jax.random.normal(k2, (DIM, HID), dtype=jnp.float32) * 0.1   # fc2.weight
    b2 = jax.random.normal(kb2, (DIM,), dtype=jnp.float32) * 0.1      # fc2.bias

    params = prepare_ffn_params(w1, b1, wu, wv, w2, b2)
    ref = feed_forward_ref(x.reshape(B * S, DIM), w1, b1, wu, wv, w2, b2).reshape(B, S, DIM)

    # Path A: weights fully VMEM-resident (what these small shapes select automatically).
    out_res = jax.block_until_ready(feed_forward(x, params, tm=256))
    assert out_res.shape == (B, S, DIM)
    err_res = float(jnp.max(jnp.abs(out_res - ref)))
    assert jnp.allclose(out_res, ref, atol=3e-2, rtol=3e-2), \
        f"resident path mismatch vs reference (max abs err {err_res})"

    # Path B: hidden-dimension streaming (the large-hidden / v7x path), forced here at
    # small shapes so both code paths are compiled and checked.
    out_str = jax.block_until_ready(feed_forward(x, params, tm=256, force_stream=True))
    err_str = float(jnp.max(jnp.abs(out_str - ref)))
    assert jnp.allclose(out_str, ref, atol=3e-2, rtol=3e-2), \
        f"streamed path mismatch vs reference (max abs err {err_str})"

    print("KERNEL_OK")
</pallas_src>

<mosaic_0001>
module attributes {stable_mosaic.version = 11 : i64} {
  func.func @ffn_resident_kernel(%arg0: i32, %arg1: memref<16x128xbf16, #tpu.memory_space<vmem>>, %arg2: memref<128x128xbf16, #tpu.memory_space<vmem>>, %arg3: memref<1x128xf32, #tpu.memory_space<vmem>>, %arg4: memref<128x256xbf16, #tpu.memory_space<vmem>>, %arg5: memref<128x128xbf16, #tpu.memory_space<vmem>>, %arg6: memref<1x128xf32, #tpu.memory_space<vmem>>, %arg7: memref<16x128xbf16, #tpu.memory_space<vmem>>) attributes {dimension_semantics = [#tpu.dimension_semantics<parallel>], iteration_bounds = array<i64: 1>, scalar_prefetch = 0 : i64, scratch_operands = 0 : i64, tpu.core_type = #tpu.core_type<tc>, window_params = [{transform_indices = @transform_0, window_bounds = array<i64: 16, 128>}, {pipeline_mode = #tpu.pipeline_mode<synchronous>, transform_indices = @transform_1, window_bounds = array<i64: 128, 128>}, {pipeline_mode = #tpu.pipeline_mode<synchronous>, transform_indices = @transform_2, window_bounds = array<i64: 1, 128>}, {pipeline_mode = #tpu.pipeline_mode<synchronous>, transform_indices = @transform_3, window_bounds = array<i64: 128, 256>}, {pipeline_mode = #tpu.pipeline_mode<synchronous>, transform_indices = @transform_4, window_bounds = array<i64: 128, 128>}, {pipeline_mode = #tpu.pipeline_mode<synchronous>, transform_indices = @transform_5, window_bounds = array<i64: 1, 128>}, {transform_indices = @transform_6, window_bounds = array<i64: 16, 128>}]} {
    %c0 = arith.constant 0 : index
    %c0_0 = arith.constant 0 : index
    %0 = vector.load %arg1[%c0, %c0_0] : memref<16x128xbf16, #tpu.memory_space<vmem>>, vector<16x128xbf16>
    %c0_1 = arith.constant 0 : index
    %c0_2 = arith.constant 0 : index
    %1 = vector.load %arg2[%c0_1, %c0_2] : memref<128x128xbf16, #tpu.memory_space<vmem>>, vector<128x128xbf16>
    %cst = arith.constant dense<0.000000e+00> : vector<16x128xf32>
    %2 = tpu.matmul %0, %1, %cst {dimension_numbers = #tpu.dot_dimension_numbers<[1], [0], [0], [1], [0, 0, 1, 1], [], []>} : vector<16x128xbf16>, vector<128x128xbf16>, vector<16x128xf32> -> vector<16x128xf32>
    %c0_3 = arith.constant 0 : index
    %c0_4 = arith.constant 0 : index
    %3 = vector.load %arg3[%c0_3, %c0_4] : memref<1x128xf32, #tpu.memory_space<vmem>>, vector<1x128xf32>
    %4 = vector.broadcast %3 : vector<1x128xf32> to vector<16x128xf32>
    %5 = arith.addf %2, %4 : vector<16x128xf32>
    %6 = arith.truncf %5 : vector<16x128xf32> to vector<16x128xbf16>
    %c0_5 = arith.constant 0 : index
    %c0_6 = arith.constant 0 : index
    %7 = vector.load %arg4[%c0_5, %c0_6] : memref<128x256xbf16, #tpu.memory_space<vmem>>, vector<128x256xbf16>
    %cst_7 = arith.constant dense<0.000000e+00> : vector<16x256xf32>
    %8 = tpu.matmul %6, %7, %cst_7 {dimension_numbers = #tpu.dot_dimension_numbers<[1], [0], [0], [1], [0, 0, 1, 1], [], []>} : vector<16x128xbf16>, vector<128x256xbf16>, vector<16x256xf32> -> vector<16x256xf32>
    %9 = vector.extract_strided_slice %8 {offsets = [0, 128], sizes = [16, 128], strides = [1, 1]} : vector<16x256xf32> to vector<16x128xf32>
    %10 = vector.extract_strided_slice %8 {offsets = [0, 0], sizes = [16, 128], strides = [1, 1]} : vector<16x256xf32> to vector<16x128xf32>
    %11 = arith.negf %9 : vector<16x128xf32>
    %12 = math.exp %11 : vector<16x128xf32>
    %cst_8 = arith.constant 1.000000e+00 : f32
    %13 = vector.broadcast %cst_8 : f32 to vector<16x128xf32>
    %14 = arith.addf %13, %12 : vector<16x128xf32>
    %15 = arith.divf %13, %14 : vector<16x128xf32>
    %16 = arith.mulf %9, %15 : vector<16x128xf32>
    %17 = arith.mulf %10, %16 : vector<16x128xf32>
    %18 = arith.truncf %17 : vector<16x128xf32> to vector<16x128xbf16>
    %c0_9 = arith.constant 0 : index
    %c0_10 = arith.constant 0 : index
    %19 = vector.load %arg5[%c0_9, %c0_10] : memref<128x128xbf16, #tpu.memory_space<vmem>>, vector<128x128xbf16>
    %cst_11 = arith.constant dense<0.000000e+00> : vector<16x128xf32>
    %20 = tpu.matmul %18, %19, %cst_11 {dimension_numbers = #tpu.dot_dimension_numbers<[1], [0], [0], [1], [0, 0, 1, 1], [], []>} : vector<16x128xbf16>, vector<128x128xbf16>, vector<16x128xf32> -> vector<16x128xf32>
    %c0_12 = arith.constant 0 : index
    %c0_13 = arith.constant 0 : index
    %21 = vector.load %arg6[%c0_12, %c0_13] : memref<1x128xf32, #tpu.memory_space<vmem>>, vector<1x128xf32>
    %22 = vector.broadcast %21 : vector<1x128xf32> to vector<16x128xf32>
    %23 = arith.addf %20, %22 : vector<16x128xf32>
    %24 = arith.truncf %23 : vector<16x128xf32> to vector<16x128xbf16>
    %c0_14 = arith.constant 0 : index
    %c0_15 = arith.constant 0 : index
    %25 = vector.load %arg7[%c0_14, %c0_15] : memref<16x128xbf16, #tpu.memory_space<vmem>>, vector<16x128xbf16>
    tpu.vector_store %arg7[%c0_14, %c0_15], %24 {strides = array<i32>} : memref<16x128xbf16, #tpu.memory_space<vmem>>, vector<16x128xbf16>,
    return
  }
  func.func @transform_0(%arg0: i32) -> (i32, i32) {
    %c0_i32 = arith.constant 0 : i32
    %c0_i32_0 = arith.constant 0 : i32
    return %arg0, %c0_i32 : i32, i32
  }
  func.func @transform_1(%arg0: i32) -> (i32, i32) {
    %c0_i32 = arith.constant 0 : i32
    %c0_i32_0 = arith.constant 0 : i32
    %c0_i32_1 = arith.constant 0 : i32
    return %c0_i32, %c0_i32_0 : i32, i32
  }
  func.func @transform_2(%arg0: i32) -> (i32, i32) {
    %c0_i32 = arith.constant 0 : i32
    %c0_i32_0 = arith.constant 0 : i32
    %c0_i32_1 = arith.constant 0 : i32
    return %c0_i32, %c0_i32_0 : i32, i32
  }
  func.func @transform_3(%arg0: i32) -> (i32, i32) {
    %c0_i32 = arith.constant 0 : i32
    %c0_i32_0 = arith.constant 0 : i32
    %c0_i32_1 = arith.constant 0 : i32
    return %c0_i32, %c0_i32_0 : i32, i32
  }
  func.func @transform_4(%arg0: i32) -> (i32, i32) {
    %c0_i32 = arith.constant 0 : i32
    %c0_i32_0 = arith.constant 0 : i32
    %c0_i32_1 = arith.constant 0 : i32
    return %c0_i32, %c0_i32_0 : i32, i32
  }
  func.func @transform_5(%arg0: i32) -> (i32, i32) {
    %c0_i32 = arith.constant 0 : i32
    %c0_i32_0 = arith.constant 0 : i32
    %c0_i32_1 = arith.constant 0 : i32
    return %c0_i32, %c0_i32_0 : i32, i32
  }
  func.func @transform_6(%arg0: i32) -> (i32, i32) {
    %c0_i32 = arith.constant 0 : i32
    %c0_i32_0 = arith.constant 0 : i32
    return %arg0, %c0_i32 : i32, i32
  }
}

module attributes {stable_mosaic.version = 11 : i64} {
  func.func @ffn_resident_kernel(%arg0: i32, %arg1: memref<16x128xbf16, #tpu.memory_space<vmem>>, %arg2: memref<128x128xbf16, #tpu.memory_space<vmem>>, %arg3: memref<1x128xf32, #tpu.memory_space<vmem>>, %arg4: memref<128x256xbf16, #tpu.memory_space<vmem>>, %arg5: memref<128x128xbf16, #tpu.memory_space<vmem>>, %arg6: memref<1x128xf32, #tpu.memory_space<vmem>>, %arg7: memref<16x128xbf16, #tpu.memory_space<vmem>>) attributes {dimension_semantics = [#tpu.dimension_semantics<parallel>], iteration_bounds = array<i64: 1>, scalar_prefetch = 0 : i64, scratch_operands = 0 : i64, tpu.core_type = #tpu.core_type<tc>, window_params = [{transform_indices = @transform_0, window_bounds = array<i64: 16, 128>}, {pipeline_mode = #tpu.pipeline_mode<synchronous>, transform_indices = @transform_1, window_bounds = array<i64: 128, 128>}, {pipeline_mode = #tpu.pipeline_mode<synchronous>, transform_indices = @transform_2, window_bounds = array<i64: 1, 128>}, {pipeline_mode = #tpu.pipeline_mode<synchronous>, transform_indices = @transform_3, window_bounds = array<i64: 128, 256>}, {pipeline_mode = #tpu.pipeline_mode<synchronous>, transform_indices = @transform_4, window_bounds = array<i64: 128, 128>}, {pipeline_mode = #tpu.pipeline_mode<synchronous>, transform_indices = @transform_5, window_bounds = array<i64: 1, 128>}, {transform_indices = @transform_6, window_bounds = array<i64: 16, 128>}]} {
    %c0 = arith.constant 0 : index
    %c0_0 = arith.constant 0 : index
    %0 = vector.load %arg1[%c0, %c0_0] : memref<16x128xbf16, #tpu.memory_space<vmem>>, vector<16x128xbf16>
    %c0_1 = arith.constant 0 : index
    %c0_2 = arith.constant 0 : index
    %1 = vector.load %arg2[%c0_1, %c0_2] : memref<128x128xbf16, #tpu.memory_space<vmem>>, vector<128x128xbf16>
    %cst = arith.constant dense<0.000000e+00> : vector<16x128xf32>
    %2 = tpu.matmul %0, %1, %cst {dimension_numbers = #tpu.dot_dimension_numbers<[1], [0], [0], [1], [0, 0, 1, 1], [], []>} : vector<16x128xbf16>, vector<128x128xbf16>, vector<16x128xf32> -> vector<16x128xf32>
    %c0_3 = arith.constant 0 : index
    %c0_4 = arith.constant 0 : index
    %3 = vector.load %arg3[%c0_3, %c0_4] : memref<1x128xf32, #tpu.memory_space<vmem>>, vector<1x128xf32>
    %4 = vector.broadcast %3 : vector<1x128xf32> to vector<16x128xf32>
    %5 = arith.addf %2, %4 : vector<16x128xf32>
    %6 = arith.truncf %5 : vector<16x128xf32> to vector<16x128xbf16>
    %c0_5 = arith.constant 0 : index
    %c0_6 = arith.constant 0 : index
    %7 = vector.load %arg4[%c0_5, %c0_6] : memref<128x256xbf16, #tpu.memory_space<vmem>>, vector<128x256xbf16>
    %cst_7 = arith.constant dense<0.000000e+00> : vector<16x256xf32>
    %8 = tpu.matmul %6, %7, %cst_7 {dimension_numbers = #tpu.dot_dimension_numbers<[1], [0], [0], [1], [0, 0, 1, 1], [], []>} : vector<16x128xbf16>, vector<128x256xbf16>, vector<16x256xf32> -> vector<16x256xf32>
    %9 = vector.extract_strided_slice %8 {offsets = [0, 128], sizes = [16, 128], strides = [1, 1]} : vector<16x256xf32> to vector<16x128xf32>
    %10 = vector.extract_strided_slice %8 {offsets = [0, 0], sizes = [16, 128], strides = [1, 1]} : vector<16x256xf32> to vector<16x128xf32>
    %11 = arith.negf %9 : vector<16x128xf32>
    %12 = math.exp %11 : vector<16x128xf32>
    %cst_8 = arith.constant 1.000000e+00 : f32
    %13 = vector.broadcast %cst_8 : f32 to vector<16x128xf32>
    %14 = arith.addf %13, %12 : vector<16x128xf32>
    %15 = arith.divf %13, %14 : vector<16x128xf32>
    %16 = arith.mulf %9, %15 : vector<16x128xf32>
    %17 = arith.mulf %10, %16 : vector<16x128xf32>
    %18 = arith.truncf %17 : vector<16x128xf32> to vector<16x128xbf16>
    %c0_9 = arith.constant 0 : index
    %c0_10 = arith.constant 0 : index
    %19 = vector.load %arg5[%c0_9, %c0_10] : memref<128x128xbf16, #tpu.memory_space<vmem>>, vector<128x128xbf16>
    %cst_11 = arith.constant dense<0.000000e+00> : vector<16x128xf32>
    %20 = tpu.matmul %18, %19, %cst_11 {dimension_numbers = #tpu.dot_dimension_numbers<[1], [0], [0], [1], [0, 0, 1, 1], [], []>} : vector<16x128xbf16>, vector<128x128xbf16>, vector<16x128xf32> -> vector<16x128xf32>
    %c0_12 = arith.constant 0 : index
    %c0_13 = arith.constant 0 : index
    %21 = vector.load %arg6[%c0_12, %c0_13] : memref<1x128xf32, #tpu.memory_space<vmem>>, vector<1x128xf32>
    %22 = vector.broadcast %21 : vector<1x128xf32> to vector<16x128xf32>
    %23 = arith.addf %20, %22 : vector<16x128xf32>
    %24 = arith.truncf %23 : vector<16x128xf32> to vector<16x128xbf16>
    %c0_14 = arith.constant 0 : index
    %c0_15 = arith.constant 0 : index
    %25 = vector.load %arg7[%c0_14, %c0_15] : memref<16x128xbf16, #tpu.memory_space<vmem>>, vector<16x128xbf16>
    tpu.vector_store %arg7[%c0_14, %c0_15], %24 {strides = array<i32>} : memref<16x128xbf16, #tpu.memory_space<vmem>>, vector<16x128xbf16>,
    return
  }
  func.func @transform_0(%arg0: i32) -> (i32, i32) {
    %c0_i32 = arith.constant 0 : i32
    %c0_i32_0 = arith.constant 0 : i32
    return %arg0, %c0_i32 : i32, i32
  }
  func.func @transform_1(%arg0: i32) -> (i32, i32) {
    %c0_i32 = arith.constant 0 : i32
    %c0_i32_0 = arith.constant 0 : i32
    %c0_i32_1 = arith.constant 0 : i32
    return %c0_i32, %c0_i32_0 : i32, i32
  }
  func.func @transform_2(%arg0: i32) -> (i32, i32) {
    %c0_i32 = arith.constant 0 : i32
    %c0_i32_0 = arith.constant 0 : i32
    %c0_i32_1 = arith.constant 0 : i32
    return %c0_i32, %c0_i32_0 : i32, i32
  }
  func.func @transform_3(%arg0: i32) -> (i32, i32) {
    %c0_i32 = arith.constant 0 : i32
    %c0_i32_0 = arith.constant 0 : i32
    %c0_i32_1 = arith.constant 0 : i32
    return %c0_i32, %c0_i32_0 : i32, i32
  }
  func.func @transform_4(%arg0: i32) -> (i32, i32) {
    %c0_i32 = arith.constant 0 : i32
    %c0_i32_0 = arith.constant 0 : i32
    %c0_i32_1 = arith.constant 0 : i32
    return %c0_i32, %c0_i32_0 : i32, i32
  }
  func.func @transform_5(%arg0: i32) -> (i32, i32) {
    %c0_i32 = arith.constant 0 : i32
    %c0_i32_0 = arith.constant 0 : i32
    %c0_i32_1 = arith.constant 0 : i32
    return %c0_i32, %c0_i32_0 : i32, i32
  }
  func.func @transform_6(%arg0: i32) -> (i32, i32) {
    %c0_i32 = arith.constant 0 : i32
    %c0_i32_0 = arith.constant 0 : i32
    return %arg0, %c0_i32 : i32, i32
  }
}

</mosaic_0001>

<llo_original>
// kernel: tpu_custom_call.1
$region0: #{tpu_custom_call.1}
  #allocation0 [shape = 'u32[]', space=smem, size = 0x4, offset = 0x4, fixed_abs, tag = 'smem constant byte address 0x4 - core index']
  #allocation1 [shape = 'u32[144,128]{1,0:T(1,128)}', space=vmem, size = 0x12000, scoped, tag = 'internal scratch']
  %s0 = inlined_call_operand.hbm [shape: bf16[16,128], index: 0, kind: input, shape index: {}]
  %s1 = inlined_call_operand.hbm [shape: bf16[128,128], index: 1, kind: input, shape index: {}]
  %s2 = inlined_call_operand.vmem [shape: f32[1,128], index: 2, kind: input, shape index: {}]
  %s3 = inlined_call_operand.hbm [shape: bf16[128,256], index: 3, kind: input, shape index: {}]
  %s4 = inlined_call_operand.hbm [shape: bf16[128,128], index: 4, kind: input, shape index: {}]
  %s5 = inlined_call_operand.vmem [shape: f32[1,128], index: 5, kind: input, shape index: {}]
  %s6 = inlined_call_operand.hbm [shape: bf16[16,128], index: 6, kind: output, shape index: {}]
  %s7 = sld [smem:[#allocation0]]
  $region50: #{tpu_custom_call.1} parent=0
    _
  %s9 = ssub.s32 1, %s7
  %s10 = scalar_select 0, %s9, %s7
  $region1: #{tpu_custom_call.1} parent=0
    #allocation2 [shape = 'u8[4096]{0}', space=vmem, size = 0x1000, scoped, tag = 'input window, operand 0, single buffered']
    #allocation3 [shape = 's32[1]{0}', space=sflag, size = 0x4, scoped, tag = 'scoped memory for tpu_custom_call.1']
    #allocation4 [shape = 's32[1]{0}', space=sflag, size = 0x4, scoped, tag = 'scoped memory for tpu_custom_call.1']
    #allocation5 [shape = 'u8[32768]{0}', space=vmem, size = 0x8000, scoped, tag = 'input window, operand 1, single buffered']
    #allocation6 [shape = 's32[1]{0}', space=sflag, size = 0x4, scoped, tag = 'scoped memory for tpu_custom_call.1']
    #allocation7 [shape = 'u8[65536]{0}', space=vmem, size = 0x10000, scoped, tag = 'input window, operand 3, single buffered']
    #allocation8 [shape = 'u8[32768]{0}', space=vmem, size = 0x8000, scoped, tag = 'input window, operand 4, single buffered']
    #allocation9 [shape = 's32[1]{0}', space=sflag, size = 0x4, scoped, tag = 'scoped memory for tpu_custom_call.1']
    #allocation10 [shape = 'u8[4096]{0}', space=vmem, size = 0x1000, scoped, tag = 'output window, operand 0, single buffered']
    %11 = vsyncpa [#allocation3], 0
    %12 = vsyncpa [#allocation6], 0
    %13 = vsyncpa [#allocation9], 0
    %14 = vsyncpa [#allocation4], 0
    // Predicated region
    $region2: #{tpu_custom_call.1} parent=1 // pred_check
      _
    $region3: #{tpu_custom_call.1} parent=1 // pred_check_branch
      %16 = sbr.rel (0) target = $region5
    $region4: #{tpu_custom_call.1} parent=1 // pred_region
      %s18 = ssub.s32 128, 128
      %19 = vsyncadd [#allocation3], %s18
      %s20 = sshll.u32 [#allocation2], 4
      %s21 = int_to_ptr.vmem [resolvable:$true] %s20
      %26 = dma.hbm_to_vmem [thread:$0]  %s0, 128, %s21, [#allocation3], 64, 64, 4
    $region5: #{tpu_custom_call.1} parent=1 // pred_fallthru
      _
    // Predicated region
    $region6: #{tpu_custom_call.1} parent=1 // pred_check
      _
    $region7: #{tpu_custom_call.1} parent=1 // pred_check_branch
      %28 = sbr.rel (0) target = $region9
    $region8: #{tpu_custom_call.1} parent=1 // pred_region
      %s30 = ssub.s32 1024, 1024
      %31 = vsyncadd [#allocation6], %s30
      %s32 = sshll.u32 [#allocation5], 4
      %s33 = int_to_ptr.vmem [resolvable:$true] %s32
      %38 = dma.hbm_to_vmem [thread:$0]  %s1, 1024, %s33, [#allocation6], 64, 64, 4
    $region9: #{tpu_custom_call.1} parent=1 // pred_fallthru
      _
    // Predicated region
    $region10: #{tpu_custom_call.1} parent=1 // pred_check
      _
    $region11: #{tpu_custom_call.1} parent=1 // pred_check_branch
      %40 = sbr.rel (0) target = $region13
    $region12: #{tpu_custom_call.1} parent=1 // pred_region
      _
    $region13: #{tpu_custom_call.1} parent=1 // pred_fallthru
      _
    // Predicated region
    $region14: #{tpu_custom_call.1} parent=1 // pred_check
      _
    $region15: #{tpu_custom_call.1} parent=1 // pred_check_branch
      %42 = sbr.rel (0) target = $region17
    $region16: #{tpu_custom_call.1} parent=1 // pred_region
      %s44 = ssub.s32 2048, 2048
      %45 = vsyncadd [#allocation6], %s44
      %s46 = sshll.u32 [#allocation7], 4
      %s47 = int_to_ptr.vmem [resolvable:$true] %s46
      %52 = dma.hbm_to_vmem [thread:$0]  %s3, 2048, %s47, [#allocation6], 128, 128, 8
    $region17: #{tpu_custom_call.1} parent=1 // pred_fallthru
      _
    // Predicated region
    $region18: #{tpu_custom_call.1} parent=1 // pred_check
      _
    $region19: #{tpu_custom_call.1} parent=1 // pred_check_branch
      %54 = sbr.rel (0) target = $region21
    $region20: #{tpu_custom_call.1} parent=1 // pred_region
      %s56 = ssub.s32 1024, 1024
      %57 = vsyncadd [#allocation9], %s56
      %s58 = sshll.u32 [#allocation8], 4
      %s59 = int_to_ptr.vmem [resolvable:$true] %s58
      %64 = dma.hbm_to_vmem [thread:$0]  %s4, 1024, %s59, [#allocation9], 64, 64, 4
    $region21: #{tpu_custom_call.1} parent=1 // pred_fallthru
      _
    // Predicated region
    $region22: #{tpu_custom_call.1} parent=1 // pred_check
      _
    $region23: #{tpu_custom_call.1} parent=1 // pred_check_branch
      %66 = sbr.rel (0) target = $region25
    $region24: #{tpu_custom_call.1} parent=1 // pred_region
      _
    $region25: #{tpu_custom_call.1} parent=1 // pred_fallthru
      _
    // Predicated region
    $region26: #{tpu_custom_call.1} parent=1 // pred_check
      _
    $region27: #{tpu_custom_call.1} parent=1 // pred_check_branch
      %68 = sbr.rel (0) target = $region29
    $region28: #{tpu_custom_call.1} parent=1 // pred_region
      %69 = dma.done [#allocation3], 128
    $region29: #{tpu_custom_call.1} parent=1 // pred_fallthru
      _
    // Predicated region
    $region30: #{tpu_custom_call.1} parent=1 // pred_check
      _
    $region31: #{tpu_custom_call.1} parent=1 // pred_check_branch
      %71 = sbr.rel (0) target = $region33
    $region32: #{tpu_custom_call.1} parent=1 // pred_region
      %72 = dma.done [#allocation6], 1024
    $region33: #{tpu_custom_call.1} parent=1 // pred_fallthru
      _
    // Predicated region
    $region34: #{tpu_custom_call.1} parent=1 // pred_check
      _
    $region35: #{tpu_custom_call.1} parent=1 // pred_check_branch
      %74 = sbr.rel (0) target = $region37
    $region36: #{tpu_custom_call.1} parent=1 // pred_region
      %75 = dma.done [#allocation6], 2048
    $region37: #{tpu_custom_call.1} parent=1 // pred_fallthru
      _
    // Predicated region
    $region38: #{tpu_custom_call.1} parent=1 // pred_check
      _
    $region39: #{tpu_custom_call.1} parent=1 // pred_check_branch
      %77 = sbr.rel (0) target = $region41
    $region40: #{tpu_custom_call.1} parent=1 // pred_region
      %78 = dma.done [#allocation9], 1024
    $region41: #{tpu_custom_call.1} parent=1 // pred_fallthru
      _
    %v80 = vld [vmem:[#allocation2] sm:$0xf]
    %v81 = vld [vmem:[#allocation2 + $0x4] sm:$0xf]
    %v82 = vld [vmem:[#allocation5] sm:$0xf]
    %v83 = vld [vmem:[#allocation5 + $0x4] sm:$0xf]
    %v84 = vld [vmem:[#allocation5 + $0x8] sm:$0xf]
    %v85 = vld [vmem:[#allocation5 + $0xc] sm:$0xf]
    %v86 = vld [vmem:[#allocation5 + $0x10] sm:$0xf]
    %v87 = vld [vmem:[#allocation5 + $0x14] sm:$0xf]
    %v88 = vld [vmem:[#allocation5 + $0x18] sm:$0xf]
    %v89 = vld [vmem:[#allocation5 + $0x1c] sm:$0xf]
    %v90 = vld [vmem:[#allocation5 + $0x20] sm:$0xf]
    %v91 = vld [vmem:[#allocation5 + $0x24] sm:$0xf]
    %v92 = vld [vmem:[#allocation5 + $0x28] sm:$0xf]
    %v93 = vld [vmem:[#allocation5 + $0x2c] sm:$0xf]
    %v94 = vld [vmem:[#allocation5 + $0x30] sm:$0xf]
    %v95 = vld [vmem:[#allocation5 + $0x34] sm:$0xf]
    %v96 = vld [vmem:[#allocation5 + $0x38] sm:$0xf]
    %v97 = vld [vmem:[#allocation5 + $0x3c] sm:$0xf]
    %v98 = vld [vmem:[%s2] sm:$0x1]
    %v100 = vlaneseq
    %v101 = vshrl.u32 %v100, 7
    %v102 = vsub.s32 0, %v101
    %v103 = vrot.slane %v98, %v102
    %v107 = vunpack.c.l.b16 %v80
    %v108 = vunpack.c.l.b16 %v81
    %v109 = vpack.c.b16 %v108, %v107
    %v127 = vunpack.c.l.b16 %v82
    %v128 = vunpack.c.l.b16 %v83
    %v129 = vunpack.c.l.b16 %v84
    %v130 = vunpack.c.l.b16 %v85
    %v131 = vunpack.c.l.b16 %v86
    %v132 = vunpack.c.l.b16 %v87
    %v133 = vunpack.c.l.b16 %v88
    %v134 = vunpack.c.l.b16 %v89
    %v135 = vunpack.c.l.b16 %v90
    %v136 = vunpack.c.l.b16 %v91
    %v137 = vunpack.c.l.b16 %v92
    %v138 = vunpack.c.l.b16 %v93
    %v139 = vunpack.c.l.b16 %v94
    %v140 = vunpack.c.l.b16 %v95
    %v141 = vunpack.c.l.b16 %v96
    %v142 = vunpack.c.l.b16 %v97
    %v143 = vpack.c.b16 %v128, %v127
    %v144 = vpack.c.b16 %v130, %v129
    %v145 = vpack.c.b16 %v132, %v131
    %v146 = vpack.c.b16 %v134, %v133
    %v147 = vpack.c.b16 %v136, %v135
    %v148 = vpack.c.b16 %v138, %v137
    %v149 = vpack.c.b16 %v140, %v139
    %v150 = vpack.c.b16 %v142, %v141
    %159 = vmatprep.subr.bf16.mxu0 0
    %160 = vmatpush1.bf16.msra.mxu0 %v143
    %161 = vmatprep.subr.bf16.mxu0 0
    %162 = vmatpush1.bf16.msra.mxu0 %v144
    %163 = vmatprep.subr.bf16.mxu0 0
    %164 = vmatpush1.bf16.msra.mxu0 %v145
    %165 = vmatprep.subr.bf16.mxu0 0
    %166 = vmatpush1.bf16.msra.mxu0 %v146
    %167 = vmatprep.subr.bf16.mxu0 0
    %168 = vmatpush1.bf16.msra.mxu0 %v147
    %169 = vmatprep.subr.bf16.mxu0 0
    %170 = vmatpush1.bf16.msra.mxu0 %v148
    %171 = vmatprep.subr.bf16.mxu0 0
    %172 = vmatpush1.bf16.msra.mxu0 %v149
    %173 = vmatprep.subr.bf16.mxu0 0
    %174 = vmatpush1.bf16.msra.mxu0 %v150
    %175 = vmatprep.subr.bf16.mxu0 0
    %176 = vmatpush1.bf16.msra.mxu0 0
    %177 = vmatprep.subr.bf16.mxu0 0
    %178 = vmatpush1.bf16.msra.mxu0 0
    %179 = vmatprep.subr.bf16.mxu0 0
    %180 = vmatpush1.bf16.msra.mxu0 0
    %181 = vmatprep.subr.bf16.mxu0 0
    %182 = vmatpush1.bf16.msra.mxu0 0
    %183 = vmatprep.subr.bf16.mxu0 0
    %184 = vmatpush1.bf16.msra.mxu0 0
    %185 = vmatprep.subr.bf16.mxu0 0
    %186 = vmatpush1.bf16.msra.mxu0 0
    %187 = vmatprep.subr.bf16.mxu0 0
    %188 = vmatpush1.bf16.msra.mxu0 0
    %189 = vmatprep.subr.bf16.mxu0 0
    %190 = vmatpush1.bf16.msra.mxu0 0
    %191 = vmatprep.mubr.bf16.mxu0 0
    %192 = vmatmul.mubr.bf16.gmra.mrb[0].mxu0 %v109
    %v193 = vpop.f32.mrb[0].mxu0
    %v194 = vadd.f32 %v103, %v193
    %v195 = vpop.f32.mrb[0].mxu0
    %v196 = vpop.f32.mrb[0].mxu0
    %v197 = vadd.f32 %v103, %v196
    %v198 = vpop.f32.mrb[0].mxu0
    %199 = vdwg.mxu0
    %v200 = vpack.c.bf16 %v197, %v194
    %v201 = vld [vmem:[#allocation7] sm:$0xff]
    %v202 = vld [vmem:[#allocation7 + $0x8] sm:$0xff]
    %v203 = vld [vmem:[#allocation7 + $0x10] sm:$0xff]
    %v204 = vld [vmem:[#allocation7 + $0x18] sm:$0xff]
    %v205 = vld [vmem:[#allocation7 + $0x20] sm:$0xff]
    %v206 = vld [vmem:[#allocation7 + $0x28] sm:$0xff]
    %v207 = vld [vmem:[#allocation7 + $0x30] sm:$0xff]
    %v208 = vld [vmem:[#allocation7 + $0x38] sm:$0xff]
    %v209 = vld [vmem:[#allocation7 + $0x40] sm:$0xff]
    %v210 = vld [vmem:[#allocation7 + $0x48] sm:$0xff]
    %v211 = vld [vmem:[#allocation7 + $0x50] sm:$0xff]
    %v212 = vld [vmem:[#allocation7 + $0x58] sm:$0xff]
    %v213 = vld [vmem:[#allocation7 + $0x60] sm:$0xff]
    %v214 = vld [vmem:[#allocation7 + $0x68] sm:$0xff]
    %v215 = vld [vmem:[#allocation7 + $0x70] sm:$0xff]
    %v216 = vld [vmem:[#allocation7 + $0x78] sm:$0xff]
    %v233 = vunpack.c.l.b16 %v201
    %v234 = vunpack.c.h.b16 %v201
    %v235 = vunpack.c.l.b16 %v202
    %v236 = vunpack.c.h.b16 %v202
    %v237 = vunpack.c.l.b16 %v203
    %v238 = vunpack.c.h.b16 %v203
    %v239 = vunpack.c.l.b16 %v204
    %v240 = vunpack.c.h.b16 %v204
    %v241 = vunpack.c.l.b16 %v205
    %v242 = vunpack.c.h.b16 %v205
    %v243 = vunpack.c.l.b16 %v206
    %v244 = vunpack.c.h.b16 %v206
    %v245 = vunpack.c.l.b16 %v207
    %v246 = vunpack.c.h.b16 %v207
    %v247 = vunpack.c.l.b16 %v208
    %v248 = vunpack.c.h.b16 %v208
    %v249 = vunpack.c.l.b16 %v209
    %v250 = vunpack.c.h.b16 %v209
    %v251 = vunpack.c.l.b16 %v210
    %v252 = vunpack.c.h.b16 %v210
    %v253 = vunpack.c.l.b16 %v211
    %v254 = vunpack.c.h.b16 %v211
    %v255 = vunpack.c.l.b16 %v212
    %v256 = vunpack.c.h.b16 %v212
    %v257 = vunpack.c.l.b16 %v213
    %v258 = vunpack.c.h.b16 %v213
    %v259 = vunpack.c.l.b16 %v214
    %v260 = vunpack.c.h.b16 %v214
    %v261 = vunpack.c.l.b16 %v215
    %v262 = vunpack.c.h.b16 %v215
    %v263 = vunpack.c.l.b16 %v216
    %v264 = vunpack.c.h.b16 %v216
    %v265 = vpack.c.b16 %v235, %v233
    %v266 = vpack.c.b16 %v236, %v234
    %v267 = vpack.c.b16 %v239, %v237
    %v268 = vpack.c.b16 %v240, %v238
    %v269 = vpack.c.b16 %v243, %v241
    %v270 = vpack.c.b16 %v244, %v242
    %v271 = vpack.c.b16 %v247, %v245
    %v272 = vpack.c.b16 %v248, %v246
    %v273 = vpack.c.b16 %v251, %v249
    %v274 = vpack.c.b16 %v252, %v250
    %v275 = vpack.c.b16 %v255, %v253
    %v276 = vpack.c.b16 %v256, %v254
    %v277 = vpack.c.b16 %v259, %v257
    %v278 = vpack.c.b16 %v260, %v258
    %v279 = vpack.c.b16 %v263, %v261
    %v280 = vpack.c.b16 %v264, %v262
    %297 = vmatprep.subr.bf16.mxu0 %v266
    %298 = vmatpush1.bf16.msra.mxu0 %v265
    %299 = vmatprep.subr.bf16.mxu0 %v268
    %300 = vmatpush1.bf16.msra.mxu0 %v267
    %301 = vmatprep.subr.bf16.mxu0 %v270
    %302 = vmatpush1.bf16.msra.mxu0 %v269
    %303 = vmatprep.subr.bf16.mxu0 %v272
    %304 = vmatpush1.bf16.msra.mxu0 %v271
    %305 = vmatprep.subr.bf16.mxu0 %v274
    %306 = vmatpush1.bf16.msra.mxu0 %v273
    %307 = vmatprep.subr.bf16.mxu0 %v276
    %308 = vmatpush1.bf16.msra.mxu0 %v275
    %309 = vmatprep.subr.bf16.mxu0 %v278
    %310 = vmatpush1.bf16.msra.mxu0 %v277
    %311 = vmatprep.subr.bf16.mxu0 %v280
    %312 = vmatpush1.bf16.msra.mxu0 %v279
    %313 = vmatprep.subr.bf16.mxu0 0
    %314 = vmatpush1.bf16.msra.mxu0 0
    %315 = vmatprep.subr.bf16.mxu0 0
    %316 = vmatpush1.bf16.msra.mxu0 0
    %317 = vmatprep.subr.bf16.mxu0 0
    %318 = vmatpush1.bf16.msra.mxu0 0
    %319 = vmatprep.subr.bf16.mxu0 0
    %320 = vmatpush1.bf16.msra.mxu0 0
    %321 = vmatprep.subr.bf16.mxu0 0
    %322 = vmatpush1.bf16.msra.mxu0 0
    %323 = vmatprep.subr.bf16.mxu0 0
    %324 = vmatpush1.bf16.msra.mxu0 0
    %325 = vmatprep.subr.bf16.mxu0 0
    %326 = vmatpush1.bf16.msra.mxu0 0
    %327 = vmatprep.subr.bf16.mxu0 0
    %328 = vmatpush1.bf16.msra.mxu0 0
    %329 = vmatprep.mubr.bf16.mxu0 0
    %330 = vmatmul.mubr.bf16.gmra.mrb[0].mxu0 %v200
    %v331 = vpop.f32.mrb[0].mxu0
    %v332 = vadd.f32 0.0, %v331
    %v333 = vpop.f32.mrb[0].mxu0
    %v334 = vadd.f32 0.0, %v333
    %v335 = vpop.f32.mrb[0].mxu0
    %v336 = vadd.f32 0.0, %v335
    %v337 = vpop.f32.mrb[0].mxu0
    %v338 = vadd.f32 0.0, %v337
    %339 = vdwg.mxu0
    %v340 = vxor.u32 %v334, 2147483648
    %v341 = vxor.u32 %v338, 2147483648
    %v342 = vmul.f32 %v340, 1.442695
    %v343 = vpow.pop %v342
    %v344 = vmul.f32 %v341, 1.442695
    %v345 = vpow.pop %v344
    %v346 = vadd.f32 %v343, 1.0
    %v347 = vadd.f32 %v345, 1.0
    %v348 = vrcp.pop %v346
    %v349 = vmul.f32 1.0, %v348
    %v350 = vrcp.pop %v347
    %v351 = vmul.f32 1.0, %v350
    %v352 = vmul.f32 %v334, %v349
    %v353 = vmul.f32 %v338, %v351
    %v354 = vmul.f32 %v332, %v352
    %v355 = vmul.f32 %v336, %v353
    %v356 = vpack.c.bf16 %v355, %v354
    %v357 = vld [vmem:[#allocation8] sm:$0xf]
    %v358 = vld [vmem:[#allocation8 + $0x4] sm:$0xf]
    %v359 = vld [vmem:[#allocation8 + $0x8] sm:$0xf]
    %v360 = vld [vmem:[#allocation8 + $0xc] sm:$0xf]
    %v361 = vld [vmem:[#allocation8 + $0x10] sm:$0xf]
    %v362 = vld [vmem:[#allocation8 + $0x14] sm:$0xf]
    %v363 = vld [vmem:[#allocation8 + $0x18] sm:$0xf]
    %v364 = vld [vmem:[#allocation8 + $0x1c] sm:$0xf]
    %v365 = vld [vmem:[#allocation8 + $0x20] sm:$0xf]
    %v366 = vld [vmem:[#allocation8 + $0x24] sm:$0xf]
    %v367 = vld [vmem:[#allocation8 + $0x28] sm:$0xf]
    %v368 = vld [vmem:[#allocation8 + $0x2c] sm:$0xf]
    %v369 = vld [vmem:[#allocation8 + $0x30] sm:$0xf]
    %v370 = vld [vmem:[#allocation8 + $0x34] sm:$0xf]
    %v371 = vld [vmem:[#allocation8 + $0x38] sm:$0xf]
    %v372 = vld [vmem:[#allocation8 + $0x3c] sm:$0xf]
    %v373 = vld [vmem:[%s5] sm:$0x1]
    %v375 = vlaneseq
    %v376 = vshrl.u32 %v375, 7
    %v377 = vsub.s32 0, %v376
    %v378 = vrot.slane %v373, %v377
    %v396 = vunpack.c.l.b16 %v357
    %v397 = vunpack.c.l.b16 %v358
    %v398 = vunpack.c.l.b16 %v359
    %v399 = vunpack.c.l.b16 %v360
    %v400 = vunpack.c.l.b16 %v361
    %v401 = vunpack.c.l.b16 %v362
    %v402 = vunpack.c.l.b16 %v363
    %v403 = vunpack.c.l.b16 %v364
    %v404 = vunpack.c.l.b16 %v365
    %v405 = vunpack.c.l.b16 %v366
    %v406 = vunpack.c.l.b16 %v367
    %v407 = vunpack.c.l.b16 %v368
    %v408 = vunpack.c.l.b16 %v369
    %v409 = vunpack.c.l.b16 %v370
    %v410 = vunpack.c.l.b16 %v371
    %v411 = vunpack.c.l.b16 %v372
    %v412 = vpack.c.b16 %v397, %v396
    %v413 = vpack.c.b16 %v399, %v398
    %v414 = vpack.c.b16 %v401, %v400
    %v415 = vpack.c.b16 %v403, %v402
    %v416 = vpack.c.b16 %v405, %v404
    %v417 = vpack.c.b16 %v407, %v406
    %v418 = vpack.c.b16 %v409, %v408
    %v419 = vpack.c.b16 %v411, %v410
    %428 = vmatprep.subr.bf16.mxu0 0
    %429 = vmatpush1.bf16.msra.mxu0 %v412
    %430 = vmatprep.subr.bf16.mxu0 0
    %431 = vmatpush1.bf16.msra.mxu0 %v413
    %432 = vmatprep.subr.bf16.mxu0 0
    %433 = vmatpush1.bf16.msra.mxu0 %v414
    %434 = vmatprep.subr.bf16.mxu0 0
    %435 = vmatpush1.bf16.msra.mxu0 %v415
    %436 = vmatprep.subr.bf16.mxu0 0
    %437 = vmatpush1.bf16.msra.mxu0 %v416
    %438 = vmatprep.subr.bf16.mxu0 0
    %439 = vmatpush1.bf16.msra.mxu0 %v417
    %440 = vmatprep.subr.bf16.mxu0 0
    %441 = vmatpush1.bf16.msra.mxu0 %v418
    %442 = vmatprep.subr.bf16.mxu0 0
    %443 = vmatpush1.bf16.msra.mxu0 %v419
    %444 = vmatprep.subr.bf16.mxu0 0
    %445 = vmatpush1.bf16.msra.mxu0 0
    %446 = vmatprep.subr.bf16.mxu0 0
    %447 = vmatpush1.bf16.msra.mxu0 0
    %448 = vmatprep.subr.bf16.mxu0 0
    %449 = vmatpush1.bf16.msra.mxu0 0
    %450 = vmatprep.subr.bf16.mxu0 0
    %451 = vmatpush1.bf16.msra.mxu0 0
    %452 = vmatprep.subr.bf16.mxu0 0
    %453 = vmatpush1.bf16.msra.mxu0 0
    %454 = vmatprep.subr.bf16.mxu0 0
    %455 = vmatpush1.bf16.msra.mxu0 0
    %456 = vmatprep.subr.bf16.mxu0 0
    %457 = vmatpush1.bf16.msra.mxu0 0
    %458 = vmatprep.subr.bf16.mxu0 0
    %459 = vmatpush1.bf16.msra.mxu0 0
    %460 = vmatprep.mubr.bf16.mxu0 0
    %461 = vmatmul.mubr.bf16.gmra.mrb[0].mxu0 %v356
    %v462 = vpop.f32.mrb[0].mxu0
    %v463 = vadd.f32 %v378, %v462
    %v464 = vpop.f32.mrb[0].mxu0
    %v465 = vpop.f32.mrb[0].mxu0
    %v466 = vadd.f32 %v378, %v465
    %v467 = vpop.f32.mrb[0].mxu0
    %468 = vdwg.mxu0
    %v469 = vpack.c.bf16 %v466, %v463
    %v471 = vunpack.c.l.b16 %v469
    %v472 = vunpack.c.h.b16 %v469
    %v473 = vpack.c.b16 %v471, %v471
    %v474 = vpack.c.b16 %v472, %v472
    %477 = vst [vmem:[#allocation10] sm:$0xf] %v473
    %478 = vst [vmem:[#allocation10 + $0x4] sm:$0xf] %v474
    // Predicated region
    $region42: #{tpu_custom_call.1} parent=1 // pred_check
      _
    $region43: #{tpu_custom_call.1} parent=1 // pred_check_branch
      %480 = sbr.rel (0) target = $region45
    $region44: #{tpu_custom_call.1} parent=1 // pred_region
      %s482 = ssub.s32 128, 128
      %483 = vsyncadd [#allocation4], %s482
      %s484 = sshll.u32 [#allocation10], 4
      %s485 = int_to_ptr.vmem [resolvable:$true] %s484
      %490 = dma.vmem_to_hbm [thread:$0]  %s485, 128, %s6, [#allocation4], 64, 64, 4
    $region45: #{tpu_custom_call.1} parent=1 // pred_fallthru
      _
    // Predicated region
    $region46: #{tpu_custom_call.1} parent=1 // pred_check
      _
    $region47: #{tpu_custom_call.1} parent=1 // pred_check_branch
      %492 = sbr.rel (0) target = $region49
    $region48: #{tpu_custom_call.1} parent=1 // pred_region
      %493 = dma.done [#allocation4], 128
    $region49: #{tpu_custom_call.1} parent=1 // pred_fallthru
      _
    %494 = vsyncpa [#allocation3], 1
    %495 = vsyncpa [#allocation6], 1
    %496 = vsyncpa [#allocation9], 1
    %497 = vsyncpa [#allocation4], 1

// kernel: tpu_custom_call.1
$region0: #{tpu_custom_call.1}
  #allocation0 [shape = 'u32[]', space=smem, size = 0x4, offset = 0x4, fixed_abs, tag = 'smem constant byte address 0x4 - core index']
  #allocation1 [shape = 'u32[144,128]{1,0:T(1,128)}', space=vmem, size = 0x12000, scoped, tag = 'internal scratch']
  %s0 = inlined_call_operand.hbm [shape: bf16[16,128], index: 0, kind: input, shape index: {}]
  %s1 = inlined_call_operand.hbm [shape: bf16[128,128], index: 1, kind: input, shape index: {}]
  %s2 = inlined_call_operand.vmem [shape: f32[1,128], index: 2, kind: input, shape index: {}]
  %s3 = inlined_call_operand.hbm [shape: bf16[128,256], index: 3, kind: input, shape index: {}]
  %s4 = inlined_call_operand.hbm [shape: bf16[128,128], index: 4, kind: input, shape index: {}]
  %s5 = inlined_call_operand.vmem [shape: f32[1,128], index: 5, kind: input, shape index: {}]
  %s6 = inlined_call_operand.hbm [shape: bf16[16,128], index: 6, kind: output, shape index: {}]
  %s7 = sld [smem:[#allocation0]]
  $region50: #{tpu_custom_call.1} parent=0
    _
  %s9 = ssub.s32 1, %s7
  %s10 = scalar_select 0, %s9, %s7
  $region1: #{tpu_custom_call.1} parent=0
    #allocation2 [shape = 'u8[4096]{0}', space=vmem, size = 0x1000, scoped, tag = 'input window, operand 0, single buffered']
    #allocation3 [shape = 's32[1]{0}', space=sflag, size = 0x4, scoped, tag = 'scoped memory for tpu_custom_call.1']
    #allocation4 [shape = 's32[1]{0}', space=sflag, size = 0x4, scoped, tag = 'scoped memory for tpu_custom_call.1']
    #allocation5 [shape = 'u8[32768]{0}', space=vmem, size = 0x8000, scoped, tag = 'input window, operand 1, single buffered']
    #allocation6 [shape = 's32[1]{0}', space=sflag, size = 0x4, scoped, tag = 'scoped memory for tpu_custom_call.1']
    #allocation7 [shape = 'u8[65536]{0}', space=vmem, size = 0x10000, scoped, tag = 'input window, operand 3, single buffered']
    #allocation8 [shape = 'u8[32768]{0}', space=vmem, size = 0x8000, scoped, tag = 'input window, operand 4, single buffered']
    #allocation9 [shape = 's32[1]{0}', space=sflag, size = 0x4, scoped, tag = 'scoped memory for tpu_custom_call.1']
    #allocation10 [shape = 'u8[4096]{0}', space=vmem, size = 0x1000, scoped, tag = 'output window, operand 0, single buffered']
    %11 = vsyncpa [#allocation3], 0
    %12 = vsyncpa [#allocation6], 0
    %13 = vsyncpa [#allocation9], 0
    %14 = vsyncpa [#allocation4], 0
    // Predicated region
    $region2: #{tpu_custom_call.1} parent=1 // pred_check
      _
    $region3: #{tpu_custom_call.1} parent=1 // pred_check_branch
      %16 = sbr.rel (0) target = $region5
    $region4: #{tpu_custom_call.1} parent=1 // pred_region
      %s18 = ssub.s32 128, 128
      %19 = vsyncadd [#allocation3], %s18
      %s20 = sshll.u32 [#allocation2], 4
      %s21 = int_to_ptr.vmem [resolvable:$true] %s20
      %26 = dma.hbm_to_vmem [thread:$0]  %s0, 128, %s21, [#allocation3], 64, 64, 4
    $region5: #{tpu_custom_call.1} parent=1 // pred_fallthru
      _
    // Predicated region
    $region6: #{tpu_custom_call.1} parent=1 // pred_check
      _
    $region7: #{tpu_custom_call.1} parent=1 // pred_check_branch
      %28 = sbr.rel (0) target = $region9
    $region8: #{tpu_custom_call.1} parent=1 // pred_region
      %s30 = ssub.s32 1024, 1024
      %31 = vsyncadd [#allocation6], %s30
      %s32 = sshll.u32 [#allocation5], 4
      %s33 = int_to_ptr.vmem [resolvable:$true] %s32
      %38 = dma.hbm_to_vmem [thread:$0]  %s1, 1024, %s33, [#allocation6], 64, 64, 4
    $region9: #{tpu_custom_call.1} parent=1 // pred_fallthru
      _
    // Predicated region
    $region10: #{tpu_custom_call.1} parent=1 // pred_check
      _
    $region11: #{tpu_custom_call.1} parent=1 // pred_check_branch
      %40 = sbr.rel (0) target = $region13
    $region12: #{tpu_custom_call.1} parent=1 // pred_region
      _
    $region13: #{tpu_custom_call.1} parent=1 // pred_fallthru
      _
    // Predicated region
    $region14: #{tpu_custom_call.1} parent=1 // pred_check
      _
    $region15: #{tpu_custom_call.1} parent=1 // pred_check_branch
      %42 = sbr.rel (0) target = $region17
    $region16: #{tpu_custom_call.1} parent=1 // pred_region
      %s44 = ssub.s32 2048, 2048
      %45 = vsyncadd [#allocation6], %s44
      %s46 = sshll.u32 [#allocation7], 4
      %s47 = int_to_ptr.vmem [resolvable:$true] %s46
      %52 = dma.hbm_to_vmem [thread:$0]  %s3, 2048, %s47, [#allocation6], 128, 128, 8
    $region17: #{tpu_custom_call.1} parent=1 // pred_fallthru
      _
    // Predicated region
    $region18: #{tpu_custom_call.1} parent=1 // pred_check
      _
    $region19: #{tpu_custom_call.1} parent=1 // pred_check_branch
      %54 = sbr.rel (0) target = $region21
    $region20: #{tpu_custom_call.1} parent=1 // pred_region
      %s56 = ssub.s32 1024, 1024
      %57 = vsyncadd [#allocation9], %s56
      %s58 = sshll.u32 [#allocation8], 4
      %s59 = int_to_ptr.vmem [resolvable:$true] %s58
      %64 = dma.hbm_to_vmem [thread:$0]  %s4, 1024, %s59, [#allocation9], 64, 64, 4
    $region21: #{tpu_custom_call.1} parent=1 // pred_fallthru
      _
    // Predicated region
    $region22: #{tpu_custom_call.1} parent=1 // pred_check
      _
    $region23: #{tpu_custom_call.1} parent=1 // pred_check_branch
      %66 = sbr.rel (0) target = $region25
    $region24: #{tpu_custom_call.1} parent=1 // pred_region
      _
    $region25: #{tpu_custom_call.1} parent=1 // pred_fallthru
      _
    // Predicated region
    $region26: #{tpu_custom_call.1} parent=1 // pred_check
      _
    $region27: #{tpu_custom_call.1} parent=1 // pred_check_branch
      %68 = sbr.rel (0) target = $region29
    $region28: #{tpu_custom_call.1} parent=1 // pred_region
      %69 = dma.done [#allocation3], 128
    $region29: #{tpu_custom_call.1} parent=1 // pred_fallthru
      _
    // Predicated region
    $region30: #{tpu_custom_call.1} parent=1 // pred_check
      _
    $region31: #{tpu_custom_call.1} parent=1 // pred_check_branch
      %71 = sbr.rel (0) target = $region33
    $region32: #{tpu_custom_call.1} parent=1 // pred_region
      %72 = dma.done [#allocation6], 1024
    $region33: #{tpu_custom_call.1} parent=1 // pred_fallthru
      _
    // Predicated region
    $region34: #{tpu_custom_call.1} parent=1 // pred_check
      _
    $region35: #{tpu_custom_call.1} parent=1 // pred_check_branch
      %74 = sbr.rel (0) target = $region37
    $region36: #{tpu_custom_call.1} parent=1 // pred_region
      %75 = dma.done [#allocation6], 2048
    $region37: #{tpu_custom_call.1} parent=1 // pred_fallthru
      _
    // Predicated region
    $region38: #{tpu_custom_call.1} parent=1 // pred_check
      _
    $region39: #{tpu_custom_call.1} parent=1 // pred_check_branch
      %77 = sbr.rel (0) target = $region41
    $region40: #{tpu_custom_call.1} parent=1 // pred_region
      %78 = dma.done [#allocation9], 1024
    $region41: #{tpu_custom_call.1} parent=1 // pred_fallthru
      _
    %v80 = vld [vmem:[#allocation2] sm:$0xf]
    %v81 = vld [vmem:[#allocation2 + $0x4] sm:$0xf]
    %v82 = vld [vmem:[#allocation5] sm:$0xf]
    %v83 = vld [vmem:[#allocation5 + $0x4] sm:$0xf]
    %v84 = vld [vmem:[#allocation5 + $0x8] sm:$0xf]
    %v85 = vld [vmem:[#allocation5 + $0xc] sm:$0xf]
    %v86 = vld [vmem:[#allocation5 + $0x10] sm:$0xf]
    %v87 = vld [vmem:[#allocation5 + $0x14] sm:$0xf]
    %v88 = vld [vmem:[#allocation5 + $0x18] sm:$0xf]
    %v89 = vld [vmem:[#allocation5 + $0x1c] sm:$0xf]
    %v90 = vld [vmem:[#allocation5 + $0x20] sm:$0xf]
    %v91 = vld [vmem:[#allocation5 + $0x24] sm:$0xf]
    %v92 = vld [vmem:[#allocation5 + $0x28] sm:$0xf]
    %v93 = vld [vmem:[#allocation5 + $0x2c] sm:$0xf]
    %v94 = vld [vmem:[#allocation5 + $0x30] sm:$0xf]
    %v95 = vld [vmem:[#allocation5 + $0x34] sm:$0xf]
    %v96 = vld [vmem:[#allocation5 + $0x38] sm:$0xf]
    %v97 = vld [vmem:[#allocation5 + $0x3c] sm:$0xf]
    %v98 = vld [vmem:[%s2] sm:$0x1]
    %v100 = vlaneseq
    %v101 = vshrl.u32 %v100, 7
    %v102 = vsub.s32 0, %v101
    %v103 = vrot.slane %v98, %v102
    %v107 = vunpack.c.l.b16 %v80
    %v108 = vunpack.c.l.b16 %v81
    %v109 = vpack.c.b16 %v108, %v107
    %v127 = vunpack.c.l.b16 %v82
    %v128 = vunpack.c.l.b16 %v83
    %v129 = vunpack.c.l.b16 %v84
    %v130 = vunpack.c.l.b16 %v85
    %v131 = vunpack.c.l.b16 %v86
    %v132 = vunpack.c.l.b16 %v87
    %v133 = vunpack.c.l.b16 %v88
    %v134 = vunpack.c.l.b16 %v89
    %v135 = vunpack.c.l.b16 %v90
    %v136 = vunpack.c.l.b16 %v91
    %v137 = vunpack.c.l.b16 %v92
    %v138 = vunpack.c.l.b16 %v93
    %v139 = vunpack.c.l.b16 %v94
    %v140 = vunpack.c.l.b16 %v95
    %v141 = vunpack.c.l.b16 %v96
    %v142 = vunpack.c.l.b16 %v97
    %v143 = vpack.c.b16 %v128, %v127
    %v144 = vpack.c.b16 %v130, %v129
    %v145 = vpack.c.b16 %v132, %v131
    %v146 = vpack.c.b16 %v134, %v133
    %v147 = vpack.c.b16 %v136, %v135
    %v148 = vpack.c.b16 %v138, %v137
    %v149 = vpack.c.b16 %v140, %v139
    %v150 = vpack.c.b16 %v142, %v141
    %159 = vmatprep.subr.bf16.mxu0 0
    %160 = vmatpush1.bf16.msra.mxu0 %v143
    %161 = vmatprep.subr.bf16.mxu0 0
    %162 = vmatpush1.bf16.msra.mxu0 %v144
    %163 = vmatprep.subr.bf16.mxu0 0
    %164 = vmatpush1.bf16.msra.mxu0 %v145
    %165 = vmatprep.subr.bf16.mxu0 0
    %166 = vmatpush1.bf16.msra.mxu0 %v146
    %167 = vmatprep.subr.bf16.mxu0 0
    %168 = vmatpush1.bf16.msra.mxu0 %v147
    %169 = vmatprep.subr.bf16.mxu0 0
    %170 = vmatpush1.bf16.msra.mxu0 %v148
    %171 = vmatprep.subr.bf16.mxu0 0
    %172 = vmatpush1.bf16.msra.mxu0 %v149
    %173 = vmatprep.subr.bf16.mxu0 0
    %174 = vmatpush1.bf16.msra.mxu0 %v150
    %175 = vmatprep.subr.bf16.mxu0 0
    %176 = vmatpush1.bf16.msra.mxu0 0
    %177 = vmatprep.subr.bf16.mxu0 0
    %178 = vmatpush1.bf16.msra.mxu0 0
    %179 = vmatprep.subr.bf16.mxu0 0
    %180 = vmatpush1.bf16.msra.mxu0 0
    %181 = vmatprep.subr.bf16.mxu0 0
    %182 = vmatpush1.bf16.msra.mxu0 0
    %183 = vmatprep.subr.bf16.mxu0 0
    %184 = vmatpush1.bf16.msra.mxu0 0
    %185 = vmatprep.subr.bf16.mxu0 0
    %186 = vmatpush1.bf16.msra.mxu0 0
    %187 = vmatprep.subr.bf16.mxu0 0
    %188 = vmatpush1.bf16.msra.mxu0 0
    %189 = vmatprep.subr.bf16.mxu0 0
    %190 = vmatpush1.bf16.msra.mxu0 0
    %191 = vmatprep.mubr.bf16.mxu0 0
    %192 = vmatmul.mubr.bf16.gmra.mrb[0].mxu0 %v109
    %v193 = vpop.f32.mrb[0].mxu0
    %v194 = vadd.f32 %v103, %v193
    %v195 = vpop.f32.mrb[0].mxu0
    %v196 = vpop.f32.mrb[0].mxu0
    %v197 = vadd.f32 %v103, %v196
    %v198 = vpop.f32.mrb[0].mxu0
    %199 = vdwg.mxu0
    %v200 = vpack.c.bf16 %v197, %v194
    %v201 = vld [vmem:[#allocation7] sm:$0xff]
    %v202 = vld [vmem:[#allocation7 + $0x8] sm:$0xff]
    %v203 = vld [vmem:[#allocation7 + $0x10] sm:$0xff]
    %v204 = vld [vmem:[#allocation7 + $0x18] sm:$0xff]
    %v205 = vld [vmem:[#allocation7 + $0x20] sm:$0xff]
    %v206 = vld [vmem:[#allocation7 + $0x28] sm:$0xff]
    %v207 = vld [vmem:[#allocation7 + $0x30] sm:$0xff]
    %v208 = vld [vmem:[#allocation7 + $0x38] sm:$0xff]
    %v209 = vld [vmem:[#allocation7 + $0x40] sm:$0xff]
    %v210 = vld [vmem:[#allocation7 + $0x48] sm:$0xff]
    %v211 = vld [vmem:[#allocation7 + $0x50] sm:$0xff]
    %v212 = vld [vmem:[#allocation7 + $0x58] sm:$0xff]
    %v213 = vld [vmem:[#allocation7 + $0x60] sm:$0xff]
    %v214 = vld [vmem:[#allocation7 + $0x68] sm:$0xff]
    %v215 = vld [vmem:[#allocation7 + $0x70] sm:$0xff]
    %v216 = vld [vmem:[#allocation7 + $0x78] sm:$0xff]
    %v233 = vunpack.c.l.b16 %v201
    %v234 = vunpack.c.h.b16 %v201
    %v235 = vunpack.c.l.b16 %v202
    %v236 = vunpack.c.h.b16 %v202
    %v237 = vunpack.c.l.b16 %v203
    %v238 = vunpack.c.h.b16 %v203
    %v239 = vunpack.c.l.b16 %v204
    %v240 = vunpack.c.h.b16 %v204
    %v241 = vunpack.c.l.b16 %v205
    %v242 = vunpack.c.h.b16 %v205
    %v243 = vunpack.c.l.b16 %v206
    %v244 = vunpack.c.h.b16 %v206
    %v245 = vunpack.c.l.b16 %v207
    %v246 = vunpack.c.h.b16 %v207
    %v247 = vunpack.c.l.b16 %v208
    %v248 = vunpack.c.h.b16 %v208
    %v249 = vunpack.c.l.b16 %v209
    %v250 = vunpack.c.h.b16 %v209
    %v251 = vunpack.c.l.b16 %v210
    %v252 = vunpack.c.h.b16 %v210
    %v253 = vunpack.c.l.b16 %v211
    %v254 = vunpack.c.h.b16 %v211
    %v255 = vunpack.c.l.b16 %v212
    %v256 = vunpack.c.h.b16 %v212
    %v257 = vunpack.c.l.b16 %v213
    %v258 = vunpack.c.h.b16 %v213
    %v259 = vunpack.c.l.b16 %v214
    %v260 = vunpack.c.h.b16 %v214
    %v261 = vunpack.c.l.b16 %v215
    %v262 = vunpack.c.h.b16 %v215
    %v263 = vunpack.c.l.b16 %v216
    %v264 = vunpack.c.h.b16 %v216
    %v265 = vpack.c.b16 %v235, %v233
    %v266 = vpack.c.b16 %v236, %v234
    %v267 = vpack.c.b16 %v239, %v237
    %v268 = vpack.c.b16 %v240, %v238
    %v269 = vpack.c.b16 %v243, %v241
    %v270 = vpack.c.b16 %v244, %v242
    %v271 = vpack.c.b16 %v247, %v245
    %v272 = vpack.c.b16 %v248, %v246
    %v273 = vpack.c.b16 %v251, %v249
    %v274 = vpack.c.b16 %v252, %v250
    %v275 = vpack.c.b16 %v255, %v253
    %v276 = vpack.c.b16 %v256, %v254
    %v277 = vpack.c.b16 %v259, %v257
    %v278 = vpack.c.b16 %v260, %v258
    %v279 = vpack.c.b16 %v263, %v261
    %v280 = vpack.c.b16 %v264, %v262
    %297 = vmatprep.subr.bf16.mxu0 %v266
    %298 = vmatpush1.bf16.msra.mxu0 %v265
    %299 = vmatprep.subr.bf16.mxu0 %v268
    %300 = vmatpush1.bf16.msra.mxu0 %v267
    %301 = vmatprep.subr.bf16.mxu0 %v270
    %302 = vmatpush1.bf16.msra.mxu0 %v269
    %303 = vmatprep.subr.bf16.mxu0 %v272
    %304 = vmatpush1.bf16.msra.mxu0 %v271
    %305 = vmatprep.subr.bf16.mxu0 %v274
    %306 = vmatpush1.bf16.msra.mxu0 %v273
    %307 = vmatprep.subr.bf16.mxu0 %v276
    %308 = vmatpush1.bf16.msra.mxu0 %v275
    %309 = vmatprep.subr.bf16.mxu0 %v278
    %310 = vmatpush1.bf16.msra.mxu0 %v277
    %311 = vmatprep.subr.bf16.mxu0 %v280
    %312 = vmatpush1.bf16.msra.mxu0 %v279
    %313 = vmatprep.subr.bf16.mxu0 0
    %314 = vmatpush1.bf16.msra.mxu0 0
    %315 = vmatprep.subr.bf16.mxu0 0
    %316 = vmatpush1.bf16.msra.mxu0 0
    %317 = vmatprep.subr.bf16.mxu0 0
    %318 = vmatpush1.bf16.msra.mxu0 0
    %319 = vmatprep.subr.bf16.mxu0 0
    %320 = vmatpush1.bf16.msra.mxu0 0
    %321 = vmatprep.subr.bf16.mxu0 0
    %322 = vmatpush1.bf16.msra.mxu0 0
    %323 = vmatprep.subr.bf16.mxu0 0
    %324 = vmatpush1.bf16.msra.mxu0 0
    %325 = vmatprep.subr.bf16.mxu0 0
    %326 = vmatpush1.bf16.msra.mxu0 0
    %327 = vmatprep.subr.bf16.mxu0 0
    %328 = vmatpush1.bf16.msra.mxu0 0
    %329 = vmatprep.mubr.bf16.mxu0 0
    %330 = vmatmul.mubr.bf16.gmra.mrb[0].mxu0 %v200
    %v331 = vpop.f32.mrb[0].mxu0
    %v332 = vadd.f32 0.0, %v331
    %v333 = vpop.f32.mrb[0].mxu0
    %v334 = vadd.f32 0.0, %v333
    %v335 = vpop.f32.mrb[0].mxu0
    %v336 = vadd.f32 0.0, %v335
    %v337 = vpop.f32.mrb[0].mxu0
    %v338 = vadd.f32 0.0, %v337
    %339 = vdwg.mxu0
    %v340 = vxor.u32 %v334, 2147483648
    %v341 = vxor.u32 %v338, 2147483648
    %v342 = vmul.f32 %v340, 1.442695
    %v343 = vpow.pop %v342
    %v344 = vmul.f32 %v341, 1.442695
    %v345 = vpow.pop %v344
    %v346 = vadd.f32 %v343, 1.0
    %v347 = vadd.f32 %v345, 1.0
    %v348 = vrcp.pop %v346
    %v349 = vmul.f32 1.0, %v348
    %v350 = vrcp.pop %v347
    %v351 = vmul.f32 1.0, %v350
    %v352 = vmul.f32 %v334, %v349
    %v353 = vmul.f32 %v338, %v351
    %v354 = vmul.f32 %v332, %v352
    %v355 = vmul.f32 %v336, %v353
    %v356 = vpack.c.bf16 %v355, %v354
    %v357 = vld [vmem:[#allocation8] sm:$0xf]
    %v358 = vld [vmem:[#allocation8 + $0x4] sm:$0xf]
    %v359 = vld [vmem:[#allocation8 + $0x8] sm:$0xf]
    %v360 = vld [vmem:[#allocation8 + $0xc] sm:$0xf]
    %v361 = vld [vmem:[#allocation8 + $0x10] sm:$0xf]
    %v362 = vld [vmem:[#allocation8 + $0x14] sm:$0xf]
    %v363 = vld [vmem:[#allocation8 + $0x18] sm:$0xf]
    %v364 = vld [vmem:[#allocation8 + $0x1c] sm:$0xf]
    %v365 = vld [vmem:[#allocation8 + $0x20] sm:$0xf]
    %v366 = vld [vmem:[#allocation8 + $0x24] sm:$0xf]
    %v367 = vld [vmem:[#allocation8 + $0x28] sm:$0xf]
    %v368 = vld [vmem:[#allocation8 + $0x2c] sm:$0xf]
    %v369 = vld [vmem:[#allocation8 + $0x30] sm:$0xf]
    %v370 = vld [vmem:[#allocation8 + $0x34] sm:$0xf]
    %v371 = vld [vmem:[#allocation8 + $0x38] sm:$0xf]
    %v372 = vld [vmem:[#allocation8 + $0x3c] sm:$0xf]
    %v373 = vld [vmem:[%s5] sm:$0x1]
    %v375 = vlaneseq
    %v376 = vshrl.u32 %v375, 7
    %v377 = vsub.s32 0, %v376
    %v378 = vrot.slane %v373, %v377
    %v396 = vunpack.c.l.b16 %v357
    %v397 = vunpack.c.l.b16 %v358
    %v398 = vunpack.c.l.b16 %v359
    %v399 = vunpack.c.l.b16 %v360
    %v400 = vunpack.c.l.b16 %v361
    %v401 = vunpack.c.l.b16 %v362
    %v402 = vunpack.c.l.b16 %v363
    %v403 = vunpack.c.l.b16 %v364
    %v404 = vunpack.c.l.b16 %v365
    %v405 = vunpack.c.l.b16 %v366
    %v406 = vunpack.c.l.b16 %v367
    %v407 = vunpack.c.l.b16 %v368
    %v408 = vunpack.c.l.b16 %v369
    %v409 = vunpack.c.l.b16 %v370
    %v410 = vunpack.c.l.b16 %v371
    %v411 = vunpack.c.l.b16 %v372
    %v412 = vpack.c.b16 %v397, %v396
    %v413 = vpack.c.b16 %v399, %v398
    %v414 = vpack.c.b16 %v401, %v400
    %v415 = vpack.c.b16 %v403, %v402
    %v416 = vpack.c.b16 %v405, %v404
    %v417 = vpack.c.b16 %v407, %v406
    %v418 = vpack.c.b16 %v409, %v408
    %v419 = vpack.c.b16 %v411, %v410
    %428 = vmatprep.subr.bf16.mxu0 0
    %429 = vmatpush1.bf16.msra.mxu0 %v412
    %430 = vmatprep.subr.bf16.mxu0 0
    %431 = vmatpush1.bf16.msra.mxu0 %v413
    %432 = vmatprep.subr.bf16.mxu0 0
    %433 = vmatpush1.bf16.msra.mxu0 %v414
    %434 = vmatprep.subr.bf16.mxu0 0
    %435 = vmatpush1.bf16.msra.mxu0 %v415
    %436 = vmatprep.subr.bf16.mxu0 0
    %437 = vmatpush1.bf16.msra.mxu0 %v416
    %438 = vmatprep.subr.bf16.mxu0 0
    %439 = vmatpush1.bf16.msra.mxu0 %v417
    %440 = vmatprep.subr.bf16.mxu0 0
    %441 = vmatpush1.bf16.msra.mxu0 %v418
    %442 = vmatprep.subr.bf16.mxu0 0
    %443 = vmatpush1.bf16.msra.mxu0 %v419
    %444 = vmatprep.subr.bf16.mxu0 0
    %445 = vmatpush1.bf16.msra.mxu0 0
    %446 = vmatprep.subr.bf16.mxu0 0
    %447 = vmatpush1.bf16.msra.mxu0 0
    %448 = vmatprep.subr.bf16.mxu0 0
    %449 = vmatpush1.bf16.msra.mxu0 0
    %450 = vmatprep.subr.bf16.mxu0 0
    %451 = vmatpush1.bf16.msra.mxu0 0
    %452 = vmatprep.subr.bf16.mxu0 0
    %453 = vmatpush1.bf16.msra.mxu0 0
    %454 = vmatprep.subr.bf16.mxu0 0
    %455 = vmatpush1.bf16.msra.mxu0 0
    %456 = vmatprep.subr.bf16.mxu0 0
    %457 = vmatpush1.bf16.msra.mxu0 0
    %458 = vmatprep.subr.bf16.mxu0 0
    %459 = vmatpush1.bf16.msra.mxu0 0
    %460 = vmatprep.mubr.bf16.mxu0 0
    %461 = vmatmul.mubr.bf16.gmra.mrb[0].mxu0 %v356
    %v462 = vpop.f32.mrb[0].mxu0
    %v463 = vadd.f32 %v378, %v462
    %v464 = vpop.f32.mrb[0].mxu0
    %v465 = vpop.f32.mrb[0].mxu0
    %v466 = vadd.f32 %v378, %v465
    %v467 = vpop.f32.mrb[0].mxu0
    %468 = vdwg.mxu0
    %v469 = vpack.c.bf16 %v466, %v463
    %v471 = vunpack.c.l.b16 %v469
    %v472 = vunpack.c.h.b16 %v469
    %v473 = vpack.c.b16 %v471, %v471
    %v474 = vpack.c.b16 %v472, %v472
    %477 = vst [vmem:[#allocation10] sm:$0xf] %v473
    %478 = vst [vmem:[#allocation10 + $0x4] sm:$0xf] %v474
    // Predicated region
    $region42: #{tpu_custom_call.1} parent=1 // pred_check
      _
    $region43: #{tpu_custom_call.1} parent=1 // pred_check_branch
      %480 = sbr.rel (0) target = $region45
    $region44: #{tpu_custom_call.1} parent=1 // pred_region
      %s482 = ssub.s32 128, 128
      %483 = vsyncadd [#allocation4], %s482
      %s484 = sshll.u32 [#allocation10], 4
      %s485 = int_to_ptr.vmem [resolvable:$true] %s484
      %490 = dma.vmem_to_hbm [thread:$0]  %s485, 128, %s6, [#allocation4], 64, 64, 4
    $region45: #{tpu_custom_call.1} parent=1 // pred_fallthru
      _
    // Predicated region
    $region46: #{tpu_custom_call.1} parent=1 // pred_check
      _
    $region47: #{tpu_custom_call.1} parent=1 // pred_check_branch
      %492 = sbr.rel (0) target = $region49
    $region48: #{tpu_custom_call.1} parent=1 // pred_region
      %493 = dma.done [#allocation4], 128
    $region49: #{tpu_custom_call.1} parent=1 // pred_fallthru
      _
    %494 = vsyncpa [#allocation3], 1
    %495 = vsyncpa [#allocation6], 1
    %496 = vsyncpa [#allocation9], 1
    %497 = vsyncpa [#allocation4], 1

</llo_original>
